<compile_context>
chip_gen: v7x
topology: tpu7x:2x2x1
jax: 0.10.0
libtpu: 0.0.40
codegen_flags: <defaults>
</compile_context>

<pallas_src>
import numpy as np
import jax
import jax.numpy as jnp
from jax.experimental import pallas as pl
from jax.experimental.pallas import tpu as pltpu


def make_positional_encoding(d_model: int, max_len: int = 100) -> jnp.ndarray:
    """Deterministic sin/cos table, identical to the PyTorch __init__."""
    position = np.arange(0, max_len, dtype=np.float32)[:, None]            # (max_len, 1)
    div_term = np.exp(np.arange(0, d_model, 2, dtype=np.float32)
                      * (-np.log(10000.0) / d_model))                      # (ceil(d/2),)
    enc = np.zeros((max_len, d_model), dtype=np.float32)
    enc[:, 0::2] = np.sin(position * div_term)
    enc[:, 1::2] = np.cos(position * div_term[: d_model // 2])
    return jnp.asarray(enc)                                                # (max_len, d_model)


def _pos_enc_add_kernel(x_ref, enc_ref, o_ref):
    # x_ref / o_ref: (tb, tl) lane-dense tiles of the flattened (B, S*D) view.
    # enc_ref:       (1, tl) encoding slab; its batch block index is constant,
    #                so it only re-fetches when the L block changes.
    # (tb, tl) + (1, tl): one cheap sublane broadcast feeding a straight VPU add.
    o_ref[...] = x_ref[...] + enc_ref[...]


def _choose_tiles(batch: int, length: int, itemsize: int,
                  target_tile_bytes: int, min_steps: int = 4):
    """Pick (tb, tl) tile for the flattened (batch, length) view."""
    total_bytes = batch * length * itemsize
    row_bytes = length * itemsize

    # ---- lane (L) tile: only split when a full row blows the budget and the
    # split can stay a multiple of 128 lanes (otherwise use the full dim). ----
    if row_bytes <= target_tile_bytes or length % 128 != 0:
        tl = length
    else:
        max_tl = max(128, ((target_tile_bytes // itemsize) // 128) * 128)
        max_tl = min(max_tl, length)
        tl = None
        for cand in range(max_tl, 127, -128):       # prefer an even divisor of L
            if length % cand == 0:
                tl = cand
                break
        if tl is None:
            tl = max_tl                             # ragged last L block (masked, correct)
    n_l = -(-length // tl)

    # ---- sublane (batch) tile ----
    tl_bytes = tl * itemsize
    tb = max(1, target_tile_bytes // max(tl_bytes, 1))
    # Guarantee >= min_steps grid steps for pipelining / v7x megacore whenever
    # the problem is big enough that the extra per-step overhead is negligible.
    if total_bytes >= (8 << 20):
        want_b_blocks = max(1, -(-min_steps // n_l))
        tb = min(tb, max(1, -(-batch // want_b_blocks)))
    tb = min(tb, batch)
    if tb < batch:
        # Prefer a multiple-of-8 divisor of B (no ragged tail / masked stores).
        best = None
        for cand in range(tb, 7, -1):
            if cand % 8 == 0 and batch % cand == 0:
                best = cand
                break
        if best is not None:
            tb = best
        else:
            tb = max(8, (tb // 8) * 8)              # ragged tail handled by masking
            if tb >= batch:
                tb = batch
    return tb, tl


def positional_encoding_forward(x: jnp.ndarray, encoding: jnp.ndarray, *,
                                target_tile_bytes: int = 4 << 20) -> jnp.ndarray:
    """x: (B, S, D); encoding: (max_len, D). Returns x + encoding[None, :S, :]."""
    B, S, D = x.shape
    max_len = encoding.shape[0]
    if S > max_len:
        raise ValueError(f"seq_len={S} exceeds max_len={max_len} of the encoding table")

    L = S * D
    itemsize = x.dtype.itemsize
    # Glue (free reshapes / static slice / cast) stays in plain JAX.
    enc_row = encoding[:S, :].astype(x.dtype).reshape(1, L)   # (1, L)
    x2 = x.reshape(B, L)                                      # lane-dense view

    tb, tl = _choose_tiles(B, L, itemsize, target_tile_bytes)
    grid = (pl.cdiv(B, tb), pl.cdiv(L, tl))

    # Double-buffered x + out tiles dominate VMEM; leave headroom, cap for v7x.
    tile_bytes = tb * tl * itemsize
    enc_tile_bytes = tl * itemsize
    vmem_limit = int(min(max(4 * tile_bytes + 2 * enc_tile_bytes + (2 << 20), 16 << 20),
                         48 << 20))

    cost = pl.CostEstimate(
        flops=B * L,
        transcendentals=0,
        bytes_accessed=2 * B * L * itemsize + L * itemsize,
    )

    out = pl.pallas_call(
        _pos_enc_add_kernel,
        out_shape=jax.ShapeDtypeStruct((B, L), x.dtype),
        grid_spec=pltpu.PrefetchScalarGridSpec(
            num_scalar_prefetch=0,
            grid=grid,
            in_specs=[
                pl.BlockSpec((tb, tl), lambda b, j: (b, j)),   # x tile
                pl.BlockSpec((1, tl), lambda b, j: (0, j)),    # enc slab (VMEM-resident per L block)
            ],
            out_specs=pl.BlockSpec((tb, tl), lambda b, j: (b, j)),
        ),
        compiler_params=pltpu.CompilerParams(
            dimension_semantics=("parallel", "parallel"),
            vmem_limit_bytes=vmem_limit,
        ),
        cost_estimate=cost,
    )(x2, enc_row)

    return out.reshape(B, S, D)


class PositionalEncoding:
    """Thin module-like wrapper mirroring the PyTorch class (caches dtype casts)."""

    def __init__(self, d_model: int, max_len: int = 100):
        self.d_model = d_model
        self.max_len = max_len
        self.encoding = make_positional_encoding(d_model, max_len)   # (max_len, d_model) fp32
        self._cast_cache = {}

    def __call__(self, x: jnp.ndarray, *, target_tile_bytes: int = 4 << 20) -> jnp.ndarray:
        enc = self._cast_cache.get(x.dtype)
        if enc is None:
            enc = self.encoding.astype(x.dtype)
            self._cast_cache[x.dtype] = enc
        return positional_encoding_forward(x, enc, target_tile_bytes=target_tile_bytes)


if __name__ == "__main__":
    # Test 1: primary small shape (B=2, S=8, D=32) with the default tile budget.
    B, S, D = 2, 8, 32
    pe = PositionalEncoding(D, max_len=100)
    x = jax.random.normal(jax.random.PRNGKey(0), (B, S, D), dtype=jnp.float32)
    out = jax.block_until_ready(pe(x))
    ref = x + pe.encoding[None, :S, :]
    np.testing.assert_allclose(np.asarray(out), np.asarray(ref), rtol=1e-6, atol=1e-6)

    # Test 2: non-divisible batch (B % tb != 0) -> ragged last batch block.
    B2, S2, D2 = 10, 9, 32
    x2 = jax.random.normal(jax.random.PRNGKey(1), (B2, S2, D2), dtype=jnp.float32)
    enc2 = make_positional_encoding(D2, 100)
    out2 = jax.block_until_ready(
        positional_encoding_forward(x2, enc2, target_tile_bytes=8 * S2 * D2 * 4))
    ref2 = x2 + enc2[None, :S2, :]
    np.testing.assert_allclose(np.asarray(out2), np.asarray(ref2), rtol=1e-6, atol=1e-6)

    # Test 3: L-axis tiling path (grid over the flattened S*D dimension).
    B3, S3, D3 = 2, 8, 64
    x3 = jax.random.normal(jax.random.PRNGKey(2), (B3, S3, D3), dtype=jnp.float32)
    enc3 = make_positional_encoding(D3, 100)
    out3 = jax.block_until_ready(
        positional_encoding_forward(x3, enc3, target_tile_bytes=1024))
    ref3 = x3 + enc3[None, :S3, :]
    np.testing.assert_allclose(np.asarray(out3), np.asarray(ref3), rtol=1e-6, atol=1e-6)

    print("KERNEL_OK")
</pallas_src>

<mosaic_0001>
module attributes {stable_mosaic.version = 11 : i64} {
  func.func @_pos_enc_add_kernel(%arg0: i32, %arg1: i32, %arg2: memref<2x256xf32, #tpu.memory_space<vmem>>, %arg3: memref<1x256xf32, #tpu.memory_space<vmem>>, %arg4: memref<2x256xf32, #tpu.memory_space<vmem>>) attributes {dimension_semantics = [#tpu.dimension_semantics<parallel>, #tpu.dimension_semantics<parallel>], iteration_bounds = array<i64: 1, 1>, scalar_prefetch = 0 : i64, scratch_operands = 0 : i64, tpu.core_type = #tpu.core_type<tc>, window_params = [{transform_indices = @transform_0, window_bounds = array<i64: 2, 256>}, {transform_indices = @transform_1, window_bounds = array<i64: 1, 256>}, {transform_indices = @transform_2, window_bounds = array<i64: 2, 256>}]} {
    %c0 = arith.constant 0 : index
    %c0_0 = arith.constant 0 : index
    %0 = vector.load %arg2[%c0, %c0_0] : memref<2x256xf32, #tpu.memory_space<vmem>>, vector<2x256xf32>
    %c0_1 = arith.constant 0 : index
    %c0_2 = arith.constant 0 : index
    %1 = vector.load %arg3[%c0_1, %c0_2] : memref<1x256xf32, #tpu.memory_space<vmem>>, vector<1x256xf32>
    %2 = vector.broadcast %1 : vector<1x256xf32> to vector<2x256xf32>
    %3 = arith.addf %0, %2 : vector<2x256xf32>
    %c0_3 = arith.constant 0 : index
    %c0_4 = arith.constant 0 : index
    %4 = vector.load %arg4[%c0_3, %c0_4] : memref<2x256xf32, #tpu.memory_space<vmem>>, vector<2x256xf32>
    tpu.vector_store %arg4[%c0_3, %c0_4], %3 {strides = array<i32>} : memref<2x256xf32, #tpu.memory_space<vmem>>, vector<2x256xf32>,
    return
  }
  func.func @transform_0(%arg0: i32, %arg1: i32) -> (i32, i32) {
    %c0_i32 = arith.constant 0 : i32
    return %arg0, %arg1 : i32, i32
  }
  func.func @transform_1(%arg0: i32, %arg1: i32) -> (i32, i32) {
    %c0_i32 = arith.constant 0 : i32
    %c0_i32_0 = arith.constant 0 : i32
    return %c0_i32, %arg1 : i32, i32
  }
  func.func @transform_2(%arg0: i32, %arg1: i32) -> (i32, i32) {
    %c0_i32 = arith.constant 0 : i32
    return %arg0, %arg1 : i32, i32
  }
}

</mosaic_0001>

<llo_original>
// kernel: tpu_custom_call.1
$region0: #{tpu_custom_call.1}
  #allocation0 [shape = 'u32[]', space=smem, size = 0x4, offset = 0x4, fixed_abs, tag = 'smem constant byte address 0x4 - core index']
  #allocation1 [shape = 'u32[144,128]{1,0:T(1,128)}', space=vmem, size = 0x12000, scoped, tag = 'internal scratch']
  %s0 = inlined_call_operand.hbm [shape: f32[2,256], index: 0, kind: input, shape index: {}]
  %s1 = inlined_call_operand.vmem [shape: f32[1,256], index: 1, kind: input, shape index: {}]
  %s2 = inlined_call_operand.hbm [shape: f32[2,256], index: 2, kind: output, shape index: {}]
  %s3 = sld [smem:[#allocation0]]
  $region22: #{tpu_custom_call.1} parent=0
    _
  %s5 = ssub.s32 1, %s3
  %s6 = scalar_select 0, %s5, %s3
  $region1: #{tpu_custom_call.1} parent=0
    #allocation2 [shape = 'u8[2048]{0}', space=vmem, size = 0x800, scoped, tag = 'input window, operand 0, single buffered']
    #allocation3 [shape = 's32[1]{0}', space=sflag, size = 0x4, scoped, tag = 'scoped memory for tpu_custom_call.1']
    #allocation4 [shape = 's32[1]{0}', space=sflag, size = 0x4, scoped, tag = 'scoped memory for tpu_custom_call.1']
    #allocation5 [shape = 'u8[2048]{0}', space=vmem, size = 0x800, scoped, tag = 'output window, operand 0, single buffered']
    %7 = vsyncpa [#allocation3], 0
    %8 = vsyncpa [#allocation4], 0
    // Predicated region
    $region2: #{tpu_custom_call.1} parent=1 // pred_check
      _
    $region3: #{tpu_custom_call.1} parent=1 // pred_check_branch
      %10 = sbr.rel (0) target = $region5
    $region4: #{tpu_custom_call.1} parent=1 // pred_region
      %s12 = ssub.s32 64, 64
      %13 = vsyncadd [#allocation3], %s12
      %s15 = sshll.u32 [#allocation2], 4
      %s16 = int_to_ptr.vmem [resolvable:$true] %s15
      %18 = dma.hbm_to_vmem [thread:$0]  %s0, 64, %s16, [#allocation3]
    $region5: #{tpu_custom_call.1} parent=1 // pred_fallthru
      _
    // Predicated region
    $region6: #{tpu_custom_call.1} parent=1 // pred_check
      _
    $region7: #{tpu_custom_call.1} parent=1 // pred_check_branch
      %20 = sbr.rel (0) target = $region9
    $region8: #{tpu_custom_call.1} parent=1 // pred_region
      _
    $region9: #{tpu_custom_call.1} parent=1 // pred_fallthru
      _
    // Predicated region
    $region10: #{tpu_custom_call.1} parent=1 // pred_check
      _
    $region11: #{tpu_custom_call.1} parent=1 // pred_check_branch
      %22 = sbr.rel (0) target = $region13
    $region12: #{tpu_custom_call.1} parent=1 // pred_region
      %23 = dma.done [#allocation3], 64
    $region13: #{tpu_custom_call.1} parent=1 // pred_fallthru
      _
    %v24 = vld [vmem:[#allocation2] sm:$0xf]
    %v25 = vld [vmem:[%s1] sm:$0x3]
    %v27 = vlaneseq
    %v28 = vshrl.u32 %v27, 7
    %v29 = vsub.s32 0, %v28
    %v30 = vrot.slane %v25, %v29
    %v31 = vlaneseq
    %v32 = vshrl.u32 %v31, 7
    %v33 = vsub.s32 1, %v32
    %v34 = vrot.slane %v25, %v33
    %v35 = vcombine.low %v30, %v34
    %v37 = vunpack.c.l.s4 1983009808
    %v38 = vunpack.c.0.s8 %v37
    %v39 = vlaneseq
    %v40 = vshrl.u32 %v39, 7
    %v41 = vsub.s32 %v38, %v40
    %v42 = vrot.slane %v35, %v41
    %v44 = vadd.f32 %v24, %v42
    %45 = vst [vmem:[#allocation5] sm:$0xf] %v44
    // Predicated region
    $region14: #{tpu_custom_call.1} parent=1 // pred_check
      _
    $region15: #{tpu_custom_call.1} parent=1 // pred_check_branch
      %47 = sbr.rel (0) target = $region17
    $region16: #{tpu_custom_call.1} parent=1 // pred_region
      %s49 = ssub.s32 64, 64
      %50 = vsyncadd [#allocation4], %s49
      %s52 = sshll.u32 [#allocation5], 4
      %s53 = int_to_ptr.vmem [resolvable:$true] %s52
      %55 = dma.vmem_to_hbm [thread:$0]  %s53, 64, %s2, [#allocation4]
    $region17: #{tpu_custom_call.1} parent=1 // pred_fallthru
      _
    // Predicated region
    $region18: #{tpu_custom_call.1} parent=1 // pred_check
      _
    $region19: #{tpu_custom_call.1} parent=1 // pred_check_branch
      %57 = sbr.rel (0) target = $region21
    $region20: #{tpu_custom_call.1} parent=1 // pred_region
      %58 = dma.done [#allocation4], 64
    $region21: #{tpu_custom_call.1} parent=1 // pred_fallthru
      _
    %59 = vsyncpa [#allocation3], 1
    %60 = vsyncpa [#allocation4], 1

</llo_original>
